<compile_context>
chip_gen: v6e
topology: v6e:2x2x1
jax: 0.10.0
libtpu: 0.0.40
codegen_flags: <defaults>
</compile_context>

<pallas_src>
import functools

import jax
import jax.numpy as jnp
from jax.experimental import pallas as pl
from jax.experimental.pallas import tpu as pltpu


# ---------------------------------------------------------------------------
# Kernels
# ---------------------------------------------------------------------------

def _se_fused_kernel(x_ref, w1_ref, w2_ref, o_ref, *, inv_s):
    # x_ref/o_ref: (TB, C, S)   w1_ref: (C, mid)   w2_ref: (mid, C)
    x = x_ref[...]                                                # native dtype
    pooled = jnp.sum(x, axis=-1, dtype=jnp.float32) * inv_s       # (TB, C), exact mean
    w1 = w1_ref[...]
    w2 = w2_ref[...]
    y = jnp.dot(pooled.astype(w1.dtype), w1, preferred_element_type=jnp.float32)
    y = y * jax.nn.sigmoid(y)                                     # SiLU
    gate = jax.nn.sigmoid(
        jnp.dot(y.astype(w2.dtype), w2, preferred_element_type=jnp.float32))  # (TB, C)
    # Per-(b, c) scalar splat across the lane (S) axis; lane-dense store.
    o_ref[...] = (x * gate[:, :, None].astype(x.dtype)).astype(o_ref.dtype)


def _se_gate_kernel(x_ref, w1_ref, w2_ref, g_ref, *, inv_s, s_total, ts, needs_mask):
    # x_ref: (1, C, ts)   g_ref: (1, C, 1) f32 output = resident accumulator.
    si = pl.program_id(1)

    @pl.when(si == 0)
    def _():
        g_ref[...] = jnp.zeros_like(g_ref)

    if needs_mask:
        xf = x_ref[...].astype(jnp.float32)
        lane = jax.lax.broadcasted_iota(jnp.int32, xf.shape, dimension=2)
        xf = jnp.where(si * ts + lane < s_total, xf, 0.0)
        g_ref[...] += jnp.sum(xf, axis=-1, keepdims=True)
    else:
        g_ref[...] += jnp.sum(x_ref[...], axis=-1, dtype=jnp.float32, keepdims=True)

    @pl.when(si == pl.num_programs(1) - 1)
    def _():
        pooled = g_ref[...][:, :, 0] * inv_s                      # (1, C), true 1/S
        w1 = w1_ref[...]
        w2 = w2_ref[...]
        y = jnp.dot(pooled.astype(w1.dtype), w1, preferred_element_type=jnp.float32)
        y = y * jax.nn.sigmoid(y)
        g = jax.nn.sigmoid(
            jnp.dot(y.astype(w2.dtype), w2, preferred_element_type=jnp.float32))
        g_ref[...] = g[:, :, None]


def _se_scale_kernel(g_ref, x_ref, o_ref):
    # Pure elementwise rescale of a (1, C, ts) tile by the (1, C, 1) gate.
    x = x_ref[...]
    gate = g_ref[...].astype(x.dtype)                             # (1, C, 1)
    o_ref[...] = (x * gate).astype(o_ref.dtype)


# ---------------------------------------------------------------------------
# Hardware / tiling helpers
# ---------------------------------------------------------------------------

_SLACK = 256 * 1024   # headroom for small f32 intermediates / compiler scratch


def _hw_info():
    """(vmem_capacity_bytes, tensorcores_per_chip) with conservative fallbacks."""
    cap, cores = 64 << 20, 1
    try:
        info = pltpu.get_tpu_info()
        cap = int(info.vmem_capacity_bytes)
        for name in ("num_cores", "core_count", "tensorcores_per_chip", "num_tensorcores"):
            v = getattr(info, name, None)
            if v:
                cores = int(v)
                break
    except Exception:
        pass
    return cap, cores


def _vmem_limit(needed_bytes, hw_cap):
    """Mosaic vmem limit: covers the chosen tiles (plus internal scratch) and
    never exceeds a conservative fraction of physical VMEM."""
    return int(min(int(hw_cap * 0.9), max(2 * needed_bytes, 16 << 20)))


def _choose_tb(B, per_row_bytes, avail_bytes, n_cores, target_bytes):
    """Batch rows per fused grid step: big enough to amortize the ~0.35us/step
    overhead, within the VMEM budget (double-buffered in + out), and keeping
    >=2 grid steps only on dual-TensorCore chips (v7x)."""
    max_by_vmem = max(1, avail_bytes // max(4 * per_row_bytes, 1))
    tb = max(1, min(target_bytes // max(per_row_bytes, 1), max_by_vmem, B))
    if n_cores >= 2 and B >= 2:
        tb = min(tb, max(1, B // 2))
    while B % tb:                                  # clean blocking (no padded blocks)
        tb -= 1
    return int(tb)


def _choose_ts(S, bytes_per_lane, avail_bytes):
    """S-tile (lane axis) for the two-pass fallback: largest multiple of 128
    whose double-buffered in + out tiles (rescale pass is binding) fit."""
    if S <= 128:
        return int(S)
    ts = (avail_bytes // max(4 * bytes_per_lane, 1)) // 128 * 128
    ts = max(128, min(ts, S))
    # TODO(synk): if even a 128-lane tile exceeds the budget (enormous B*C), the
    # channel axis would also need tiling; we clamp to 128 and rely on vmem_limit.
    return int(ts)


# ---------------------------------------------------------------------------
# pallas_call wrappers
# ---------------------------------------------------------------------------

def _run_fused(x_bcs, w1t, w2t, inv_s, tb, vmem_limit):
    B, C, S = x_bcs.shape
    elt = jnp.dtype(x_bcs.dtype).itemsize
    mid = w1t.shape[1]
    cost = pl.CostEstimate(
        flops=int(B * C * S + 4 * B * C * mid),
        transcendentals=int(B * (mid + C)),
        bytes_accessed=int(2 * B * C * S * elt))
    return pl.pallas_call(
        functools.partial(_se_fused_kernel, inv_s=inv_s),
        out_shape=jax.ShapeDtypeStruct((B, C, S), x_bcs.dtype),
        grid_spec=pltpu.PrefetchScalarGridSpec(
            num_scalar_prefetch=0,
            grid=(B // tb,),
            in_specs=[
                pl.BlockSpec((tb, C, S), lambda b: (b, 0, 0)),
                pl.BlockSpec(w1t.shape, lambda b: (0, 0)),
                pl.BlockSpec(w2t.shape, lambda b: (0, 0)),
            ],
            out_specs=pl.BlockSpec((tb, C, S), lambda b: (b, 0, 0)),
        ),
        compiler_params=pltpu.CompilerParams(
            dimension_semantics=("parallel",),
            vmem_limit_bytes=vmem_limit),
        cost_estimate=cost,
    )(x_bcs, w1t, w2t)


def _run_two_pass(x_bcs, w1t, w2t, inv_s, ts, vmem_limit):
    B, C, S = x_bcs.shape
    elt = jnp.dtype(x_bcs.dtype).itemsize
    mid = w1t.shape[1]
    n_s = pl.cdiv(S, ts)
    needs_mask = (S % ts) != 0

    # Pass 1: per-row gates (B, C, 1) in f32.  Batch axis parallel (feeds both
    # v7x TensorCores), S axis is the streamed reduction; the output block stays
    # resident across it and doubles as the accumulator.
    gate_cost = pl.CostEstimate(
        flops=int(B * C * S + 4 * B * C * mid),
        transcendentals=int(B * (mid + C)),
        bytes_accessed=int(B * C * S * elt + B * C * 4))
    gate = pl.pallas_call(
        functools.partial(_se_gate_kernel, inv_s=inv_s, s_total=S, ts=ts,
                          needs_mask=needs_mask),
        out_shape=jax.ShapeDtypeStruct((B, C, 1), jnp.float32),
        grid_spec=pltpu.PrefetchScalarGridSpec(
            num_scalar_prefetch=0,
            grid=(B, n_s),
            in_specs=[
                pl.BlockSpec((1, C, ts), lambda b, s: (b, 0, s)),
                pl.BlockSpec(w1t.shape, lambda b, s: (0, 0)),
                pl.BlockSpec(w2t.shape, lambda b, s: (0, 0)),
            ],
            out_specs=pl.BlockSpec((1, C, 1), lambda b, s: (b, 0, 0)),
        ),
        compiler_params=pltpu.CompilerParams(
            dimension_semantics=("parallel", "arbitrary"),
            vmem_limit_bytes=vmem_limit),
        cost_estimate=gate_cost,
    )(x_bcs, w1t, w2t)

    # Pass 2: elementwise rescale, fully parallel over batch and S tiles.
    scale_cost = pl.CostEstimate(
        flops=int(B * C * S),
        transcendentals=0,
        bytes_accessed=int(2 * B * C * S * elt))
    return pl.pallas_call(
        _se_scale_kernel,
        out_shape=jax.ShapeDtypeStruct((B, C, S), x_bcs.dtype),
        grid_spec=pltpu.PrefetchScalarGridSpec(
            num_scalar_prefetch=0,
            grid=(B, n_s),
            in_specs=[
                pl.BlockSpec((1, C, 1), lambda b, s: (b, 0, 0)),
                pl.BlockSpec((1, C, ts), lambda b, s: (b, 0, s)),
            ],
            out_specs=pl.BlockSpec((1, C, ts), lambda b, s: (b, 0, s)),
        ),
        compiler_params=pltpu.CompilerParams(
            dimension_semantics=("parallel", "parallel"),
            vmem_limit_bytes=vmem_limit),
        cost_estimate=scale_cost,
    )(gate, x_bcs)


def squeeze_and_excitation(x, w1, w2, *, vmem_budget_bytes=None):
    """SE forward. x: (B, C, H, W); w1: (mid, C); w2: (C, mid) (nn.Linear, no bias)."""
    B, C, H, W = x.shape
    mid = w1.shape[0]
    S = H * W
    inv_s = 1.0 / float(S)
    elt = jnp.dtype(x.dtype).itemsize

    # Free reshape (no transpose, no extra HBM pass): NCHW -> (B, C, S).
    x_bcs = x.reshape(B, C, S)

    # Pre-transpose the Linear weights once; keep them bf16 when x is bf16
    # (native MXU path, half the weight VMEM), otherwise f32.
    wdt = jnp.bfloat16 if x.dtype == jnp.bfloat16 else jnp.float32
    w1t = jnp.asarray(w1).T.astype(wdt)   # (C, mid)
    w2t = jnp.asarray(w2).T.astype(wdt)   # (mid, C)
    w_bytes = 2 * 2 * C * mid * jnp.dtype(wdt).itemsize   # both weights, double-buffered

    hw_cap, n_cores = _hw_info()
    budget = int(hw_cap * 0.75) if vmem_budget_bytes is None else int(vmem_budget_bytes)

    # Fused-path threshold (per batch row, double-buffered in+out, plus weights):
    # ~12 MiB/row on v7x (64 MiB VMEM/TC), ~24 MiB/row on v5e/v6e (128 MiB).
    per_row_bytes = S * C * elt
    fused_ok = 4 * per_row_bytes + w_bytes + _SLACK <= budget

    if fused_ok:
        avail = budget - w_bytes - _SLACK
        # Bigger blocks on 128 MiB parts (v5e/v6e); ~2 MiB on v7x's 64 MiB VMEM.
        target = (4 << 20) if hw_cap >= (96 << 20) else (2 << 20)
        tb = _choose_tb(B, per_row_bytes, avail, n_cores, target)
        needed = 4 * tb * per_row_bytes + w_bytes + _SLACK
        out = _run_fused(x_bcs, w1t, w2t, inv_s, tb, _vmem_limit(needed, hw_cap))
    else:
        ts = _choose_ts(S, C * elt, budget - w_bytes - _SLACK)
        needed = 4 * C * ts * elt + w_bytes + _SLACK
        out = _run_two_pass(x_bcs, w1t, w2t, inv_s, ts, _vmem_limit(needed, hw_cap))

    return out.reshape(B, C, H, W)


# ---------------------------------------------------------------------------
# Reference + test
# ---------------------------------------------------------------------------

def _reference(x, w1, w2):
    pooled = jnp.mean(x, axis=(2, 3))               # (B, C)
    y = pooled @ w1.T
    y = y * jax.nn.sigmoid(y)                       # SiLU
    y = y @ w2.T
    g = jax.nn.sigmoid(y)[:, :, None, None]
    return x * g


if __name__ == "__main__":
    B, C, H, W = 2, 8, 16, 16
    squeeze_factor = 4
    mid = C // squeeze_factor

    key = jax.random.PRNGKey(0)
    kx, k1, k2 = jax.random.split(key, 3)

    x = jax.random.normal(kx, (B, C, H, W), dtype=jnp.float32)
    # nn.Linear (out, in) layout, no bias.
    w1 = jax.random.normal(k1, (mid, C), dtype=jnp.float32) * (1.0 / jnp.sqrt(C))
    w2 = jax.random.normal(k2, (C, mid), dtype=jnp.float32) * (1.0 / jnp.sqrt(mid))

    ref = _reference(x, w1, w2)

    # Path 1: fused single-pass kernel (default for feature maps that fit VMEM).
    out = jax.block_until_ready(squeeze_and_excitation(x, w1, w2))
    assert out.shape == (B, C, H, W)
    assert jnp.allclose(out, ref, atol=1e-5, rtol=1e-5), "fused path mismatch"

    # Path 2: force the two-pass (gate + rescale) fallback, S divisible by 128.
    out2 = jax.block_until_ready(
        squeeze_and_excitation(x, w1, w2, vmem_budget_bytes=16 * 1024))
    assert jnp.allclose(out2, ref, atol=1e-5, rtol=1e-5), "two-pass path mismatch"

    # Path 3: two-pass fallback with a non-dividing spatial extent (tail mask).
    x3 = jax.random.normal(kx, (B, C, 14, 14), dtype=jnp.float32)
    ref3 = _reference(x3, w1, w2)
    out3 = jax.block_until_ready(
        squeeze_and_excitation(x3, w1, w2, vmem_budget_bytes=16 * 1024))
    assert jnp.allclose(out3, ref3, atol=1e-5, rtol=1e-5), "masked-tail path mismatch"

    print("KERNEL_OK")
</pallas_src>

<mosaic_0001>
module attributes {stable_mosaic.version = 11 : i64} {
  func.func @_se_fused_kernel(%arg0: i32, %arg1: memref<2x8x256xf32, #tpu.memory_space<vmem>>, %arg2: memref<8x2xf32, #tpu.memory_space<vmem>>, %arg3: memref<2x8xf32, #tpu.memory_space<vmem>>, %arg4: memref<2x8x256xf32, #tpu.memory_space<vmem>>) attributes {dimension_semantics = [#tpu.dimension_semantics<parallel>], iteration_bounds = array<i64: 1>, scalar_prefetch = 0 : i64, scratch_operands = 0 : i64, tpu.core_type = #tpu.core_type<tc>, window_params = [{transform_indices = @transform_0, window_bounds = array<i64: 2, 8, 256>}, {pipeline_mode = #tpu.pipeline_mode<synchronous>, transform_indices = @transform_1, window_bounds = array<i64: 8, 2>}, {pipeline_mode = #tpu.pipeline_mode<synchronous>, transform_indices = @transform_2, window_bounds = array<i64: 2, 8>}, {transform_indices = @transform_3, window_bounds = array<i64: 2, 8, 256>}]} {
    %c0 = arith.constant 0 : index
    %c0_0 = arith.constant 0 : index
    %c0_1 = arith.constant 0 : index
    %0 = vector.load %arg1[%c0, %c0_0, %c0_1] : memref<2x8x256xf32, #tpu.memory_space<vmem>>, vector<2x8x256xf32>
    %cst = arith.constant dense<0.000000e+00> : vector<2x8xf32>
    %1 = vector.multi_reduction <add>, %0, %cst [2] : vector<2x8x256xf32> to vector<2x8xf32>
    %cst_2 = arith.constant 3.906250e-03 : f32
    %2 = vector.broadcast %cst_2 : f32 to vector<2x8xf32>
    %3 = arith.mulf %1, %2 : vector<2x8xf32>
    %c0_3 = arith.constant 0 : index
    %c0_4 = arith.constant 0 : index
    %4 = vector.load %arg2[%c0_3, %c0_4] : memref<8x2xf32, #tpu.memory_space<vmem>>, vector<8x2xf32>
    %c0_5 = arith.constant 0 : index
    %c0_6 = arith.constant 0 : index
    %5 = vector.load %arg3[%c0_5, %c0_6] : memref<2x8xf32, #tpu.memory_space<vmem>>, vector<2x8xf32>
    %cst_7 = arith.constant dense<0.000000e+00> : vector<2x2xf32>
    %6 = tpu.matmul %3, %4, %cst_7 {dimension_numbers = #tpu.dot_dimension_numbers<[1], [0], [0], [1], [0, 0, 1, 1], [], []>} : vector<2x8xf32>, vector<8x2xf32>, vector<2x2xf32> -> vector<2x2xf32>
    %7 = arith.negf %6 : vector<2x2xf32>
    %8 = math.exp %7 : vector<2x2xf32>
    %cst_8 = arith.constant 1.000000e+00 : f32
    %9 = vector.broadcast %cst_8 : f32 to vector<2x2xf32>
    %10 = arith.addf %9, %8 : vector<2x2xf32>
    %11 = arith.divf %9, %10 : vector<2x2xf32>
    %12 = arith.mulf %6, %11 : vector<2x2xf32>
    %cst_9 = arith.constant dense<0.000000e+00> : vector<2x8xf32>
    %13 = tpu.matmul %12, %5, %cst_9 {dimension_numbers = #tpu.dot_dimension_numbers<[1], [0], [0], [1], [0, 0, 1, 1], [], []>} : vector<2x2xf32>, vector<2x8xf32>, vector<2x8xf32> -> vector<2x8xf32>
    %14 = arith.negf %13 : vector<2x8xf32>
    %15 = math.exp %14 : vector<2x8xf32>
    %cst_10 = arith.constant 1.000000e+00 : f32
    %16 = vector.broadcast %cst_10 : f32 to vector<2x8xf32>
    %17 = arith.addf %16, %15 : vector<2x8xf32>
    %18 = arith.divf %16, %17 : vector<2x8xf32>
    %19 = vector.shape_cast %18 : vector<2x8xf32> to vector<2x8x1xf32>
    %20 = vector.broadcast %19 : vector<2x8x1xf32> to vector<2x8x256xf32>
    %21 = arith.mulf %0, %20 : vector<2x8x256xf32>
    %c0_11 = arith.constant 0 : index
    %c0_12 = arith.constant 0 : index
    %c0_13 = arith.constant 0 : index
    %22 = vector.load %arg4[%c0_11, %c0_12, %c0_13] : memref<2x8x256xf32, #tpu.memory_space<vmem>>, vector<2x8x256xf32>
    tpu.vector_store %arg4[%c0_11, %c0_12, %c0_13], %21 {strides = array<i32>} : memref<2x8x256xf32, #tpu.memory_space<vmem>>, vector<2x8x256xf32>,
    return
  }
  func.func @transform_0(%arg0: i32) -> (i32, i32, i32) {
    %c0_i32 = arith.constant 0 : i32
    %c0_i32_0 = arith.constant 0 : i32
    %c0_i32_1 = arith.constant 0 : i32
    return %arg0, %c0_i32, %c0_i32_0 : i32, i32, i32
  }
  func.func @transform_1(%arg0: i32) -> (i32, i32) {
    %c0_i32 = arith.constant 0 : i32
    %c0_i32_0 = arith.constant 0 : i32
    %c0_i32_1 = arith.constant 0 : i32
    return %c0_i32, %c0_i32_0 : i32, i32
  }
  func.func @transform_2(%arg0: i32) -> (i32, i32) {
    %c0_i32 = arith.constant 0 : i32
    %c0_i32_0 = arith.constant 0 : i32
    %c0_i32_1 = arith.constant 0 : i32
    return %c0_i32, %c0_i32_0 : i32, i32
  }
  func.func @transform_3(%arg0: i32) -> (i32, i32, i32) {
    %c0_i32 = arith.constant 0 : i32
    %c0_i32_0 = arith.constant 0 : i32
    %c0_i32_1 = arith.constant 0 : i32
    return %arg0, %c0_i32, %c0_i32_0 : i32, i32, i32
  }
}

</mosaic_0001>

<llo_original>
// kernel: tpu_custom_call.1
$region0: #{tpu_custom_call.1}
  #allocation0 [shape = 'u32[]', space=smem, size = 0x4, offset = 0x4, fixed_abs, tag = 'smem constant byte address 0x4 - core index']
  #allocation1 [shape = 'u32[144,128]{1,0:T(1,128)}', space=vmem, size = 0x12000, scoped, tag = 'internal scratch']
  %s0 = inlined_call_operand.hbm [shape: f32[2,8,256], index: 0, kind: input, shape index: {}]
  %s1 = inlined_call_operand.vmem [shape: f32[8,2], index: 1, kind: input, shape index: {}]
  %s2 = inlined_call_operand.vmem [shape: f32[2,8], index: 2, kind: input, shape index: {}]
  %s3 = inlined_call_operand.hbm [shape: f32[2,8,256], index: 3, kind: output, shape index: {}]
  %s4 = sld [smem:[#allocation0]]
  $region26: #{tpu_custom_call.1} parent=0
    _
  %s6 = ssub.s32 1, %s4
  %s7 = scalar_select 0, %s6, %s4
  $region1: #{tpu_custom_call.1} parent=0
    #allocation2 [shape = 'u8[16384]{0}', space=vmem, size = 0x4000, scoped, tag = 'input window, operand 0, single buffered']
    #allocation3 [shape = 's32[1]{0}', space=sflag, size = 0x4, scoped, tag = 'scoped memory for tpu_custom_call.1']
    #allocation4 [shape = 's32[1]{0}', space=sflag, size = 0x4, scoped, tag = 'scoped memory for tpu_custom_call.1']
    #allocation5 [shape = 'u8[16384]{0}', space=vmem, size = 0x4000, scoped, tag = 'output window, operand 0, single buffered']
    %8 = vsyncpa [#allocation3], 0
    %9 = vsyncpa [#allocation4], 0
    // Predicated region
    $region2: #{tpu_custom_call.1} parent=1 // pred_check
      _
    $region3: #{tpu_custom_call.1} parent=1 // pred_check_branch
      %11 = sbr.rel (0) target = $region5
    $region4: #{tpu_custom_call.1} parent=1 // pred_region
      %s13 = ssub.s32 512, 512
      %14 = vsyncadd [#allocation3], %s13
      %s15 = sshll.u32 [#allocation2], 4
      %s16 = int_to_ptr.vmem [resolvable:$true] %s15
      %21 = dma.hbm_to_vmem [thread:$0]  %s0, 512, %s16, [#allocation3], 256, 256, 16
    $region5: #{tpu_custom_call.1} parent=1 // pred_fallthru
      _
    // Predicated region
    $region6: #{tpu_custom_call.1} parent=1 // pred_check
      _
    $region7: #{tpu_custom_call.1} parent=1 // pred_check_branch
      %23 = sbr.rel (0) target = $region9
    $region8: #{tpu_custom_call.1} parent=1 // pred_region
      _
    $region9: #{tpu_custom_call.1} parent=1 // pred_fallthru
      _
    // Predicated region
    $region10: #{tpu_custom_call.1} parent=1 // pred_check
      _
    $region11: #{tpu_custom_call.1} parent=1 // pred_check_branch
      %25 = sbr.rel (0) target = $region13
    $region12: #{tpu_custom_call.1} parent=1 // pred_region
      _
    $region13: #{tpu_custom_call.1} parent=1 // pred_fallthru
      _
    // Predicated region
    $region14: #{tpu_custom_call.1} parent=1 // pred_check
      _
    $region15: #{tpu_custom_call.1} parent=1 // pred_check_branch
      %27 = sbr.rel (0) target = $region17
    $region16: #{tpu_custom_call.1} parent=1 // pred_region
      %28 = dma.done [#allocation3], 512
    $region17: #{tpu_custom_call.1} parent=1 // pred_fallthru
      _
    %v29 = vld [vmem:[#allocation2] sm:$0xff]
    %v30 = vld [vmem:[#allocation2 + $0x8] sm:$0xff]
    %v31 = vld [vmem:[#allocation2 + $0x10] sm:$0xff]
    %v32 = vld [vmem:[#allocation2 + $0x18] sm:$0xff]
    %v33 = vadd.f32 %v29, %v30
    %34 = vadd.xlane.f32.xlu0 %v33
    %v35 = vpop.xlane.xlu0 %34
    %v36 = vadd.f32 %v31, %v32
    %37 = vadd.xlane.f32.xlu0 %v36
    %v38 = vpop.xlane.xlu0 %37
    %v39 = vmul.f32 %v35, 0.00390625
    %v40 = vmul.f32 %v38, 0.00390625
    %v41 = vld [vmem:[%s1] sm:$0xff]
    %v42 = vld [vmem:[%s2] sm:$0x3]
    %v45 = vlaneseq
    %v46 = vand.u32 %v45, 127
    %v47 = vlaneseq
    %v48 = vshrl.u32 %v47, 7
    %v49 = vsub.s32 %v46, %v48
    %v50 = vrot.slane %v39, %v49
    %v51 = vlaneseq
    %v52 = vshrl.u32 %v51, 7
    %v53 = vsub.s32 %v46, %v52
    %v54 = vrot.slane %v40, %v53
    %vm55 = vcmask 1041409
    %v56 = vsel %vm55, %v54, %v50
    %vm57 = vcmask 64512
    %v58 = vsel %vm57, %v56, 0
    %60 = vmatprep.subr.mxu0 0.0
    %61 = vmatpush1.msra.mxu0 0.0
    %62 = vmatprep.subr.mxu0 0.0
    %63 = vmatpush1.msra.mxu0 0.0
    %64 = vmatprep.subr.mxu0 0.0
    %65 = vmatpush1.msra.mxu0 0.0
    %66 = vmatprep.subr.mxu0 0.0
    %67 = vmatpush1.msra.mxu0 0.0
    %68 = vmatprep.subr.mxu0 0.0
    %69 = vmatpush1.msra.mxu0 0.0
    %70 = vmatprep.subr.mxu0 0.0
    %71 = vmatpush1.msra.mxu0 0.0
    %72 = vmatprep.subr.mxu0 0.0
    %73 = vmatpush1.msra.mxu0 0.0
    %74 = vmatprep.subr.mxu0 0.0
    %75 = vmatpush1.msra.mxu0 0.0
    %76 = vmatprep.subr.mxu0 0.0
    %77 = vmatpush1.msra.mxu0 0.0
    %78 = vmatprep.subr.mxu0 0.0
    %79 = vmatpush1.msra.mxu0 0.0
    %80 = vmatprep.subr.mxu0 0.0
    %81 = vmatpush1.msra.mxu0 0.0
    %82 = vmatprep.subr.mxu0 0.0
    %83 = vmatpush1.msra.mxu0 0.0
    %84 = vmatprep.subr.mxu0 0.0
    %85 = vmatpush1.msra.mxu0 0.0
    %86 = vmatprep.subr.mxu0 0.0
    %87 = vmatpush1.msra.mxu0 0.0
    %88 = vmatprep.subr.mxu0 0.0
    %89 = vmatpush1.msra.mxu0 0.0
    %90 = vmatprep.subr.mxu0 0.0
    %91 = vmatpush1.msra.mxu0 %v41
    %92 = vmatprep.subr.mxu0 0.0
    %93 = vmatpush2.msra.mxu0 0.0
    %94 = vmatprep.subr.mxu0 0.0
    %95 = vmatpush2.msra.mxu0 0.0
    %96 = vmatprep.subr.mxu0 0.0
    %97 = vmatpush2.msra.mxu0 0.0
    %98 = vmatprep.subr.mxu0 0.0
    %99 = vmatpush2.msra.mxu0 0.0
    %100 = vmatprep.subr.mxu0 0.0
    %101 = vmatpush2.msra.mxu0 0.0
    %102 = vmatprep.subr.mxu0 0.0
    %103 = vmatpush2.msra.mxu0 0.0
    %104 = vmatprep.subr.mxu0 0.0
    %105 = vmatpush2.msra.mxu0 0.0
    %106 = vmatprep.subr.mxu0 0.0
    %107 = vmatpush2.msra.mxu0 0.0
    %108 = vmatprep.subr.mxu0 0.0
    %109 = vmatpush2.msra.mxu0 0.0
    %110 = vmatprep.subr.mxu0 0.0
    %111 = vmatpush2.msra.mxu0 0.0
    %112 = vmatprep.subr.mxu0 0.0
    %113 = vmatpush2.msra.mxu0 0.0
    %114 = vmatprep.subr.mxu0 0.0
    %115 = vmatpush2.msra.mxu0 0.0
    %116 = vmatprep.subr.mxu0 0.0
    %117 = vmatpush2.msra.mxu0 0.0
    %118 = vmatprep.subr.mxu0 0.0
    %119 = vmatpush2.msra.mxu0 0.0
    %120 = vmatprep.subr.mxu0 0.0
    %121 = vmatpush2.msra.mxu0 0.0
    %122 = vmatprep.subr.mxu0 0.0
    %123 = vmatpush2.msra.mxu0 0.0
    %124 = vmatprep.mubr.f32.mxu0 0.0
    %125 = vmatmul.mubr.f32.gmra.mxu0 %v58
    %v126 = vpop.f32.mrf.mxu0
    %v127 = vadd.f32 0.0, %v126
    %v128 = vpop.f32.mrf.mxu0
    %129 = vdwg.mxu0
    %v130 = vxor.u32 %v127, 2147483648
    %v131 = vmul.f32 %v130, 1.442695
    %v132 = vpow.pop %v131
    %v133 = vadd.f32 %v132, 1.0
    %v134 = vrcp.pop %v133
    %v135 = vmul.f32 1.0, %v134
    %v136 = vmul.f32 %v127, %v135
    %vm137 = vcmask 15360
    %v139 = vsel %vm137, %v136, 0
    %vm141 = vcmask 1041408
    %v143 = vsel %vm141, %v42, 0
    %145 = vmatprep.subr.mxu0 0.0
    %146 = vmatpush1.msra.mxu0 0.0
    %147 = vmatprep.subr.mxu0 0.0
    %148 = vmatpush1.msra.mxu0 0.0
    %149 = vmatprep.subr.mxu0 0.0
    %150 = vmatpush1.msra.mxu0 0.0
    %151 = vmatprep.subr.mxu0 0.0
    %152 = vmatpush1.msra.mxu0 0.0
    %153 = vmatprep.subr.mxu0 0.0
    %154 = vmatpush1.msra.mxu0 0.0
    %155 = vmatprep.subr.mxu0 0.0
    %156 = vmatpush1.msra.mxu0 0.0
    %157 = vmatprep.subr.mxu0 0.0
    %158 = vmatpush1.msra.mxu0 0.0
    %159 = vmatprep.subr.mxu0 0.0
    %160 = vmatpush1.msra.mxu0 0.0
    %161 = vmatprep.subr.mxu0 0.0
    %162 = vmatpush1.msra.mxu0 0.0
    %163 = vmatprep.subr.mxu0 0.0
    %164 = vmatpush1.msra.mxu0 0.0
    %165 = vmatprep.subr.mxu0 0.0
    %166 = vmatpush1.msra.mxu0 0.0
    %167 = vmatprep.subr.mxu0 0.0
    %168 = vmatpush1.msra.mxu0 0.0
    %169 = vmatprep.subr.mxu0 0.0
    %170 = vmatpush1.msra.mxu0 0.0
    %171 = vmatprep.subr.mxu0 0.0
    %172 = vmatpush1.msra.mxu0 0.0
    %173 = vmatprep.subr.mxu0 0.0
    %174 = vmatpush1.msra.mxu0 0.0
    %175 = vmatprep.subr.mxu0 0.0
    %176 = vmatpush1.msra.mxu0 %v143
    %177 = vmatprep.subr.mxu0 0.0
    %178 = vmatpush2.msra.mxu0 0.0
    %179 = vmatprep.subr.mxu0 0.0
    %180 = vmatpush2.msra.mxu0 0.0
    %181 = vmatprep.subr.mxu0 0.0
    %182 = vmatpush2.msra.mxu0 0.0
    %183 = vmatprep.subr.mxu0 0.0
    %184 = vmatpush2.msra.mxu0 0.0
    %185 = vmatprep.subr.mxu0 0.0
    %186 = vmatpush2.msra.mxu0 0.0
    %187 = vmatprep.subr.mxu0 0.0
    %188 = vmatpush2.msra.mxu0 0.0
    %189 = vmatprep.subr.mxu0 0.0
    %190 = vmatpush2.msra.mxu0 0.0
    %191 = vmatprep.subr.mxu0 0.0
    %192 = vmatpush2.msra.mxu0 0.0
    %193 = vmatprep.subr.mxu0 0.0
    %194 = vmatpush2.msra.mxu0 0.0
    %195 = vmatprep.subr.mxu0 0.0
    %196 = vmatpush2.msra.mxu0 0.0
    %197 = vmatprep.subr.mxu0 0.0
    %198 = vmatpush2.msra.mxu0 0.0
    %199 = vmatprep.subr.mxu0 0.0
    %200 = vmatpush2.msra.mxu0 0.0
    %201 = vmatprep.subr.mxu0 0.0
    %202 = vmatpush2.msra.mxu0 0.0
    %203 = vmatprep.subr.mxu0 0.0
    %204 = vmatpush2.msra.mxu0 0.0
    %205 = vmatprep.subr.mxu0 0.0
    %206 = vmatpush2.msra.mxu0 0.0
    %207 = vmatprep.subr.mxu0 0.0
    %208 = vmatpush2.msra.mxu0 0.0
    %209 = vmatprep.mubr.f32.mxu0 0.0
    %210 = vmatmul.mubr.f32.gmra.mxu0 %v139
    %v211 = vpop.f32.mrf.mxu0
    %v212 = vadd.f32 0.0, %v211
    %v213 = vpop.f32.mrf.mxu0
    %214 = vdwg.mxu0
    %v215 = vxor.u32 %v212, 2147483648
    %v216 = vmul.f32 %v215, 1.442695
    %v217 = vpow.pop %v216
    %v218 = vadd.f32 %v217, 1.0
    %v219 = vrcp.pop %v218
    %v220 = vmul.f32 1.0, %v219
    %v221 = vlaneseq
    %v222 = vshrl.u32 %v221, 7
    %v223 = vsub.s32 0, %v222
    %v224 = vrot.slane %v220, %v223
    %226 = vbcast.lane.b32.xlu0 %v224, 256
    %v227 = vpop.permute.xlu0 %226
    %v228 = vlaneseq
    %v229 = vshrl.u32 %v228, 7
    %v230 = vsub.s32 1, %v229
    %v231 = vrot.slane %v220, %v230
    %233 = vbcast.lane.b32.xlu0 %v231, 256
    %v234 = vpop.permute.xlu0 %233
    %v235 = vmul.f32 %v29, %v227
    %v236 = vmul.f32 %v30, %v227
    %v237 = vmul.f32 %v31, %v234
    %v238 = vmul.f32 %v32, %v234
    %239 = vst [vmem:[#allocation5] sm:$0xff] %v235
    %240 = vst [vmem:[#allocation5 + $0x8] sm:$0xff] %v236
    %241 = vst [vmem:[#allocation5 + $0x10] sm:$0xff] %v237
    %242 = vst [vmem:[#allocation5 + $0x18] sm:$0xff] %v238
    // Predicated region
    $region18: #{tpu_custom_call.1} parent=1 // pred_check
      _
    $region19: #{tpu_custom_call.1} parent=1 // pred_check_branch
      %244 = sbr.rel (0) target = $region21
    $region20: #{tpu_custom_call.1} parent=1 // pred_region
      %s246 = ssub.s32 512, 512
      %247 = vsyncadd [#allocation4], %s246
      %s248 = sshll.u32 [#allocation5], 4
      %s249 = int_to_ptr.vmem [resolvable:$true] %s248
      %254 = dma.vmem_to_hbm [thread:$0]  %s249, 512, %s3, [#allocation4], 256, 256, 16
    $region21: #{tpu_custom_call.1} parent=1 // pred_fallthru
      _
    // Predicated region
    $region22: #{tpu_custom_call.1} parent=1 // pred_check
      _
    $region23: #{tpu_custom_call.1} parent=1 // pred_check_branch
      %256 = sbr.rel (0) target = $region25
    $region24: #{tpu_custom_call.1} parent=1 // pred_region
      %257 = dma.done [#allocation4], 512
    $region25: #{tpu_custom_call.1} parent=1 // pred_fallthru
      _
    %258 = vsyncpa [#allocation3], 1
    %259 = vsyncpa [#allocation4], 1

</llo_original>
